<compile_context>
chip_gen: v5e
topology: v5e:2x2
jax: 0.10.0
libtpu: 0.0.40
codegen_flags: <defaults>
</compile_context>

<pallas_src>
import jax
import jax.numpy as jnp
from jax.experimental import pallas as pl
from jax.experimental.pallas import tpu as pltpu


def mlp_kernel(x_ref, w1_ref, b1_ref, w2_ref, b2_ref, o_ref):
    # fc1: (TB, D_in)bf16 @ (D_in, H)bf16 -> f32 accumulation on the MXU
    h = jnp.dot(x_ref[...], w1_ref[...], preferred_element_type=jnp.float32)
    h = h + b1_ref[...]                      # bias broadcast (1, H), f32 VPU
    h = jax.nn.sigmoid(h)                    # f32 on the EUP
    # fc2: (TB, H)bf16 @ (H, D_out)bf16 -> f32 accumulation
    out = jnp.dot(h.astype(w2_ref.dtype), w2_ref[...],
                  preferred_element_type=jnp.float32)
    out = out + b2_ref[...]                  # bias broadcast (1, D_out), f32
    o_ref[...] = out.astype(o_ref.dtype)


def net_forward(x, w1, b1, w2, b2, *, block_rows=256):
    """x:(B,D_in) f32; w1:(D_in,H); b1:(1,H); w2:(H,D_out); b2:(1,D_out)."""
    B, D_in = x.shape
    H = w1.shape[1]
    D_out = w2.shape[1]

    # Batch tile: multiple of 8 sublanes, capped by B and block_rows.
    tb = min(block_rows, B)
    if B % tb != 0:
        # Fall back to the largest multiple-of-8 tile (Pallas masks the
        # partial trailing block); if B itself is tiny, use the full batch.
        tb = max(8 * (tb // 8), 8) if B >= 8 else B
    grid = (pl.cdiv(B, tb),)

    # bf16 for MXU operands; biases stay f32 (adds/sigmoid run in f32).
    x_bf = x.astype(jnp.bfloat16)
    w1_bf = w1.astype(jnp.bfloat16)
    w2_bf = w2.astype(jnp.bfloat16)

    return pl.pallas_call(
        mlp_kernel,
        out_shape=jax.ShapeDtypeStruct((B, D_out), jnp.float32),
        grid=grid,
        in_specs=[
            pl.BlockSpec((tb, D_in), lambda i: (i, 0)),    # streamed per tile
            pl.BlockSpec((D_in, H), lambda i: (0, 0)),     # resident weights
            pl.BlockSpec((1, H), lambda i: (0, 0)),        # resident bias
            pl.BlockSpec((H, D_out), lambda i: (0, 0)),    # resident weights
            pl.BlockSpec((1, D_out), lambda i: (0, 0)),    # resident bias
        ],
        out_specs=pl.BlockSpec((tb, D_out), lambda i: (i, 0)),
        compiler_params=pltpu.CompilerParams(
            dimension_semantics=("parallel",),             # megacore on v7x
            vmem_limit_bytes=32 * 1024 * 1024,
        ),
    )(x_bf, w1_bf, b1, w2_bf, b2)


def init_params(key, input_dim, hidden_dim, output_dim):
    # Deterministic init mirroring nn.Linear shapes (stored transposed as
    # (in, out) for the kernel's x @ W convention).
    k1, k2, k3, k4 = jax.random.split(key, 4)
    bound1 = 1.0 / (input_dim ** 0.5)
    bound2 = 1.0 / (hidden_dim ** 0.5)
    w1 = jax.random.uniform(k1, (input_dim, hidden_dim), jnp.float32,
                            -bound1, bound1)
    b1 = jax.random.uniform(k2, (1, hidden_dim), jnp.float32, -bound1, bound1)
    w2 = jax.random.uniform(k3, (hidden_dim, output_dim), jnp.float32,
                            -bound2, bound2)
    b2 = jax.random.uniform(k4, (1, output_dim), jnp.float32, -bound2, bound2)
    return w1, b1, w2, b2


if __name__ == "__main__":
    input_dim, hidden_dim, output_dim = 32, 64, 16
    batch = 256          # fills MXU rows; 2 grid steps at TB=128

    key = jax.random.PRNGKey(0)
    kx, kp = jax.random.split(key)
    x = jax.random.normal(kx, (batch, input_dim), jnp.float32)
    w1, b1, w2, b2 = init_params(kp, input_dim, hidden_dim, output_dim)

    out = net_forward(x, w1, b1, w2, b2, block_rows=128)
    jax.block_until_ready(out)

    # Reference check in plain JAX (f32). Kernel uses bf16 MXU operands with
    # f32 accumulation, so tolerances are loosened accordingly.
    ref = jax.nn.sigmoid(x @ w1 + b1) @ w2 + b2
    assert out.shape == (batch, output_dim)
    assert jnp.allclose(out, ref, atol=3e-2, rtol=3e-2), (
        float(jnp.max(jnp.abs(out - ref))))

    print("KERNEL_OK")
</pallas_src>

<mosaic_0001>
module attributes {stable_mosaic.version = 11 : i64} {
  func.func @mlp_kernel(%arg0: i32, %arg1: memref<128x32xbf16, #tpu.memory_space<vmem>>, %arg2: memref<32x64xbf16, #tpu.memory_space<vmem>>, %arg3: memref<1x64xf32, #tpu.memory_space<vmem>>, %arg4: memref<64x16xbf16, #tpu.memory_space<vmem>>, %arg5: memref<1x16xf32, #tpu.memory_space<vmem>>, %arg6: memref<128x16xf32, #tpu.memory_space<vmem>>) attributes {dimension_semantics = [#tpu.dimension_semantics<parallel>], iteration_bounds = array<i64: 2>, scalar_prefetch = 0 : i64, scratch_operands = 0 : i64, tpu.core_type = #tpu.core_type<tc>, window_params = [{transform_indices = @transform_0, window_bounds = array<i64: 128, 32>}, {pipeline_mode = #tpu.pipeline_mode<synchronous>, transform_indices = @transform_1, window_bounds = array<i64: 32, 64>}, {pipeline_mode = #tpu.pipeline_mode<synchronous>, transform_indices = @transform_2, window_bounds = array<i64: 1, 64>}, {pipeline_mode = #tpu.pipeline_mode<synchronous>, transform_indices = @transform_3, window_bounds = array<i64: 64, 16>}, {pipeline_mode = #tpu.pipeline_mode<synchronous>, transform_indices = @transform_4, window_bounds = array<i64: 1, 16>}, {transform_indices = @transform_5, window_bounds = array<i64: 128, 16>}]} {
    %c0 = arith.constant 0 : index
    %c0_0 = arith.constant 0 : index
    %0 = vector.load %arg1[%c0, %c0_0] : memref<128x32xbf16, #tpu.memory_space<vmem>>, vector<128x32xbf16>
    %c0_1 = arith.constant 0 : index
    %c0_2 = arith.constant 0 : index
    %1 = vector.load %arg2[%c0_1, %c0_2] : memref<32x64xbf16, #tpu.memory_space<vmem>>, vector<32x64xbf16>
    %cst = arith.constant dense<0.000000e+00> : vector<128x64xf32>
    %2 = tpu.matmul %0, %1, %cst {dimension_numbers = #tpu.dot_dimension_numbers<[1], [0], [0], [1], [0, 0, 1, 1], [], []>} : vector<128x32xbf16>, vector<32x64xbf16>, vector<128x64xf32> -> vector<128x64xf32>
    %c0_3 = arith.constant 0 : index
    %c0_4 = arith.constant 0 : index
    %3 = vector.load %arg3[%c0_3, %c0_4] : memref<1x64xf32, #tpu.memory_space<vmem>>, vector<1x64xf32>
    %4 = vector.broadcast %3 : vector<1x64xf32> to vector<128x64xf32>
    %5 = arith.addf %2, %4 : vector<128x64xf32>
    %6 = arith.negf %5 : vector<128x64xf32>
    %7 = math.exp %6 : vector<128x64xf32>
    %cst_5 = arith.constant 1.000000e+00 : f32
    %8 = vector.broadcast %cst_5 : f32 to vector<128x64xf32>
    %9 = arith.addf %8, %7 : vector<128x64xf32>
    %10 = arith.divf %8, %9 : vector<128x64xf32>
    %11 = arith.truncf %10 : vector<128x64xf32> to vector<128x64xbf16>
    %c0_6 = arith.constant 0 : index
    %c0_7 = arith.constant 0 : index
    %12 = vector.load %arg4[%c0_6, %c0_7] : memref<64x16xbf16, #tpu.memory_space<vmem>>, vector<64x16xbf16>
    %cst_8 = arith.constant dense<0.000000e+00> : vector<128x16xf32>
    %13 = tpu.matmul %11, %12, %cst_8 {dimension_numbers = #tpu.dot_dimension_numbers<[1], [0], [0], [1], [0, 0, 1, 1], [], []>} : vector<128x64xbf16>, vector<64x16xbf16>, vector<128x16xf32> -> vector<128x16xf32>
    %c0_9 = arith.constant 0 : index
    %c0_10 = arith.constant 0 : index
    %14 = vector.load %arg5[%c0_9, %c0_10] : memref<1x16xf32, #tpu.memory_space<vmem>>, vector<1x16xf32>
    %15 = vector.broadcast %14 : vector<1x16xf32> to vector<128x16xf32>
    %16 = arith.addf %13, %15 : vector<128x16xf32>
    %c0_11 = arith.constant 0 : index
    %c0_12 = arith.constant 0 : index
    %17 = vector.load %arg6[%c0_11, %c0_12] : memref<128x16xf32, #tpu.memory_space<vmem>>, vector<128x16xf32>
    tpu.vector_store %arg6[%c0_11, %c0_12], %16 {strides = array<i32>} : memref<128x16xf32, #tpu.memory_space<vmem>>, vector<128x16xf32>,
    return
  }
  func.func @transform_0(%arg0: i32) -> (i32, i32) {
    %c0_i32 = arith.constant 0 : i32
    %c0_i32_0 = arith.constant 0 : i32
    return %arg0, %c0_i32 : i32, i32
  }
  func.func @transform_1(%arg0: i32) -> (i32, i32) {
    %c0_i32 = arith.constant 0 : i32
    %c0_i32_0 = arith.constant 0 : i32
    %c0_i32_1 = arith.constant 0 : i32
    return %c0_i32, %c0_i32_0 : i32, i32
  }
  func.func @transform_2(%arg0: i32) -> (i32, i32) {
    %c0_i32 = arith.constant 0 : i32
    %c0_i32_0 = arith.constant 0 : i32
    %c0_i32_1 = arith.constant 0 : i32
    return %c0_i32, %c0_i32_0 : i32, i32
  }
  func.func @transform_3(%arg0: i32) -> (i32, i32) {
    %c0_i32 = arith.constant 0 : i32
    %c0_i32_0 = arith.constant 0 : i32
    %c0_i32_1 = arith.constant 0 : i32
    return %c0_i32, %c0_i32_0 : i32, i32
  }
  func.func @transform_4(%arg0: i32) -> (i32, i32) {
    %c0_i32 = arith.constant 0 : i32
    %c0_i32_0 = arith.constant 0 : i32
    %c0_i32_1 = arith.constant 0 : i32
    return %c0_i32, %c0_i32_0 : i32, i32
  }
  func.func @transform_5(%arg0: i32) -> (i32, i32) {
    %c0_i32 = arith.constant 0 : i32
    %c0_i32_0 = arith.constant 0 : i32
    return %arg0, %c0_i32 : i32, i32
  }
}

</mosaic_0001>

<llo_original>
// kernel: tpu_custom_call.1
$region0: #{tpu_custom_call.1}
  #allocation0 [shape = 'u32[]', space=smem, size = 0x4, offset = 0x4, fixed_abs, tag = 'smem constant byte address 0x4 - core index']
  #allocation1 [shape = 'u32[72,128]{1,0:T(1,128)}', space=vmem, size = 0x9000, scoped, tag = 'internal scratch']
  %s0 = inlined_call_operand.vmem [shape: bf16[256,32], index: 0, kind: input, shape index: {}]
  %s1 = inlined_call_operand.vmem [shape: bf16[32,64], index: 1, kind: input, shape index: {}]
  %s2 = inlined_call_operand.vmem [shape: f32[1,64], index: 2, kind: input, shape index: {}]
  %s3 = inlined_call_operand.vmem [shape: bf16[64,16], index: 3, kind: input, shape index: {}]
  %s4 = inlined_call_operand.vmem [shape: f32[1,16], index: 4, kind: input, shape index: {}]
  %s5 = inlined_call_operand.vmem [shape: f32[256,16], index: 5, kind: output, shape index: {}]
  %s6 = sld [smem:[#allocation0]]
  $region53: #{tpu_custom_call.1} parent=0
    _
  %s8 = ssub.s32 1, %s6
  %s9 = scalar_select 0, %s8, %s6
  loop: start=0, step=1, limit=4
  $region2: #{tpu_custom_call.1} parent=0 // loop_pre_header
    _
  $region3: #{tpu_custom_call.1} parent=0 // loop_header
    %s11 = sphi 0, %s15
    %p12 = scmp.ge.s32.totalorder %s11, 4
    %s21 = sphi 0, %s23
    %s24 = sphi 0, %s21
    %s25 = sphi 0, %s24
    %s41 = sphi 0, %s25
    %s45 = sphi 0, %s45
    %s47 = sphi 0, %s45
    %s48 = sphi 0, %s47
    %s62 = sphi 0, %s48
    %s66 = sphi 0, %s66
    %s68 = sphi 0, %s66
    %s69 = sphi 0, %s68
    %s83 = sphi 0, %s69
    %s87 = sphi 0, %s87
    %s89 = sphi 0, %s87
    %s90 = sphi 0, %s89
    %s104 = sphi 0, %s90
    %s108 = sphi 0, %s108
    %s110 = sphi 0, %s108
    %s111 = sphi 0, %s110
    %s125 = sphi 0, %s111
    %s131 = sphi 0, %s133
    %s134 = sphi 0, %s131
    %s135 = sphi 0, %s134
    %s151 = sphi 0, %s135
  $region4: #{tpu_custom_call.1} parent=0 // loop_header_branch
    %14 = sbr.rel (%p12) target = $region8
  $region5: #{tpu_custom_call.1} parent=0 // loop_body
    %s16 = ssub.s32 %s11, 1
    %s17 = ssub.s32 %s11, 2
    %s18 = sadd.s32 %s11, 1
    %s19 = ssub.s32 %s11, %s18
    %p20 = scmp.eq.s32.totalorder %s19, 0
    %s22 = sadd.s32 %s21, 1
    %s23 = scalar_select %p20, %s21, %s22
    %p26 = pneg %p20
    %p27 = scmp.eq.s32.totalorder %s11, 1
    %p28 = por %p26, %p27
    %p29 = scmp.ne.s32.totalorder %s21, %s24
    %p30 = scmp.eq.s32.totalorder %s11, 0
    %p31 = por %p29, %p30
    %p32 = scmp.ne.s32.totalorder %s21, %s24
    %p33 = scmp.eq.s32.totalorder %s16, 1
    %p34 = por %p32, %p33
    %p35 = scmp.ne.s32.totalorder %s24, %s25
    %p36 = scmp.eq.s32.totalorder %s16, 0
    %p37 = por %p35, %p36
    %p38 = scmp.ne.s32.totalorder %s24, %s25
    %p39 = scmp.eq.s32.totalorder %s17, 1
    %p40 = por %p38, %p39
    %p42 = scmp.ne.s32.totalorder %s25, %s41
    %p43 = scmp.eq.s32.totalorder %s17, 0
    %p44 = por %p42, %p43
    %s46 = sadd.s32 %s45, 1
    %p49 = scmp.eq.s32.totalorder %s11, 1
    %p50 = scmp.ne.s32.totalorder %s45, %s47
    %p51 = scmp.eq.s32.totalorder %s11, 0
    %p52 = por %p50, %p51
    %p53 = scmp.ne.s32.totalorder %s45, %s47
    %p54 = scmp.eq.s32.totalorder %s16, 1
    %p55 = por %p53, %p54
    %p56 = scmp.ne.s32.totalorder %s47, %s48
    %p57 = scmp.eq.s32.totalorder %s16, 0
    %p58 = por %p56, %p57
    %p59 = scmp.ne.s32.totalorder %s47, %s48
    %p60 = scmp.eq.s32.totalorder %s17, 1
    %p61 = por %p59, %p60
    %p63 = scmp.ne.s32.totalorder %s48, %s62
    %p64 = scmp.eq.s32.totalorder %s17, 0
    %p65 = por %p63, %p64
    %s67 = sadd.s32 %s66, 1
    %p70 = scmp.eq.s32.totalorder %s11, 1
    %p71 = scmp.ne.s32.totalorder %s66, %s68
    %p72 = scmp.eq.s32.totalorder %s11, 0
    %p73 = por %p71, %p72
    %p74 = scmp.ne.s32.totalorder %s66, %s68
    %p75 = scmp.eq.s32.totalorder %s16, 1
    %p76 = por %p74, %p75
    %p77 = scmp.ne.s32.totalorder %s68, %s69
    %p78 = scmp.eq.s32.totalorder %s16, 0
    %p79 = por %p77, %p78
    %p80 = scmp.ne.s32.totalorder %s68, %s69
    %p81 = scmp.eq.s32.totalorder %s17, 1
    %p82 = por %p80, %p81
    %p84 = scmp.ne.s32.totalorder %s69, %s83
    %p85 = scmp.eq.s32.totalorder %s17, 0
    %p86 = por %p84, %p85
    %s88 = sadd.s32 %s87, 1
    %p91 = scmp.eq.s32.totalorder %s11, 1
    %p92 = scmp.ne.s32.totalorder %s87, %s89
    %p93 = scmp.eq.s32.totalorder %s11, 0
    %p94 = por %p92, %p93
    %p95 = scmp.ne.s32.totalorder %s87, %s89
    %p96 = scmp.eq.s32.totalorder %s16, 1
    %p97 = por %p95, %p96
    %p98 = scmp.ne.s32.totalorder %s89, %s90
    %p99 = scmp.eq.s32.totalorder %s16, 0
    %p100 = por %p98, %p99
    %p101 = scmp.ne.s32.totalorder %s89, %s90
    %p102 = scmp.eq.s32.totalorder %s17, 1
    %p103 = por %p101, %p102
    %p105 = scmp.ne.s32.totalorder %s90, %s104
    %p106 = scmp.eq.s32.totalorder %s17, 0
    %p107 = por %p105, %p106
    %s109 = sadd.s32 %s108, 1
    %p112 = scmp.eq.s32.totalorder %s11, 1
    %p113 = scmp.ne.s32.totalorder %s108, %s110
    %p114 = scmp.eq.s32.totalorder %s11, 0
    %p115 = por %p113, %p114
    %p116 = scmp.ne.s32.totalorder %s108, %s110
    %p117 = scmp.eq.s32.totalorder %s16, 1
    %p118 = por %p116, %p117
    %p119 = scmp.ne.s32.totalorder %s110, %s111
    %p120 = scmp.eq.s32.totalorder %s16, 0
    %p121 = por %p119, %p120
    %p122 = scmp.ne.s32.totalorder %s110, %s111
    %p123 = scmp.eq.s32.totalorder %s17, 1
    %p124 = por %p122, %p123
    %p126 = scmp.ne.s32.totalorder %s111, %s125
    %p127 = scmp.eq.s32.totalorder %s17, 0
    %p128 = por %p126, %p127
    %s129 = ssub.s32 %s11, %s18
    %p130 = scmp.eq.s32.totalorder %s129, 0
    %s132 = sadd.s32 %s131, 1
    %s133 = scalar_select %p130, %s131, %s132
    %p136 = pneg %p130
    %p137 = scmp.eq.s32.totalorder %s11, 1
    %p138 = por %p136, %p137
    %p139 = scmp.ne.s32.totalorder %s131, %s134
    %p140 = scmp.eq.s32.totalorder %s11, 0
    %p141 = por %p139, %p140
    %p142 = scmp.ne.s32.totalorder %s131, %s134
    %p143 = scmp.eq.s32.totalorder %s16, 1
    %p144 = por %p142, %p143
    %p145 = scmp.ne.s32.totalorder %s134, %s135
    %p146 = scmp.eq.s32.totalorder %s16, 0
    %p147 = por %p145, %p146
    %p148 = scmp.ne.s32.totalorder %s134, %s135
    %p149 = scmp.eq.s32.totalorder %s17, 1
    %p150 = por %p148, %p149
    %p152 = scmp.ne.s32.totalorder %s135, %s151
    %p153 = scmp.eq.s32.totalorder %s17, 0
    %p154 = por %p152, %p153
    %p155 = scmp.le.s32.totalorder 1, %s11
    %p156 = scmp.lt.s32.totalorder %s11, 3
    %p157 = pnand %p155, %p156
    %p158 = pneg %p157
    // Predicated region
    $region9: #{tpu_custom_call.1} parent=5 // pred_check
      _
    $region10: #{tpu_custom_call.1} parent=5 // pred_check_branch
      %160 = sbr.rel (%p157) target = $region12
    $region11: #{tpu_custom_call.1} parent=5 // pred_region
      %s161 = ssub.s32 %s11, 1
      // Predicated region
      $region13: #{tpu_custom_call.1} parent=11 // pred_check
        %p162 = pneg %p58
      $region14: #{tpu_custom_call.1} parent=11 // pred_check_branch
        %164 = sbr.rel (%p162) target = $region16
      $region15: #{tpu_custom_call.1} parent=11 // pred_region
        _
      $region16: #{tpu_custom_call.1} parent=11 // pred_fallthru
        _
      // Predicated region
      $region17: #{tpu_custom_call.1} parent=11 // pred_check
        %p165 = pneg %p79
      $region18: #{tpu_custom_call.1} parent=11 // pred_check_branch
        %167 = sbr.rel (%p165) target = $region20
      $region19: #{tpu_custom_call.1} parent=11 // pred_region
        _
      $region20: #{tpu_custom_call.1} parent=11 // pred_fallthru
        _
      // Predicated region
      $region21: #{tpu_custom_call.1} parent=11 // pred_check
        %p168 = pneg %p100
      $region22: #{tpu_custom_call.1} parent=11 // pred_check_branch
        %170 = sbr.rel (%p168) target = $region24
      $region23: #{tpu_custom_call.1} parent=11 // pred_region
        _
      $region24: #{tpu_custom_call.1} parent=11 // pred_fallthru
        _
      // Predicated region
      $region25: #{tpu_custom_call.1} parent=11 // pred_check
        %p171 = pneg %p121
      $region26: #{tpu_custom_call.1} parent=11 // pred_check_branch
        %173 = sbr.rel (%p171) target = $region28
      $region27: #{tpu_custom_call.1} parent=11 // pred_region
        _
      $region28: #{tpu_custom_call.1} parent=11 // pred_fallthru
        _
    $region12: #{tpu_custom_call.1} parent=5 // pred_fallthru
      _
    %p174 = scmp.lt.s32.totalorder %s11, 2
    // Predicated region
    $region29: #{tpu_custom_call.1} parent=5 // pred_check
      %p175 = pneg %p174
    $region30: #{tpu_custom_call.1} parent=5 // pred_check_branch
      %177 = sbr.rel (%p175) target = $region32
    $region31: #{tpu_custom_call.1} parent=5 // pred_region
      // Predicated region
      $region33: #{tpu_custom_call.1} parent=31 // pred_check
        %p178 = pneg %p31
      $region34: #{tpu_custom_call.1} parent=31 // pred_check_branch
        %180 = sbr.rel (%p178) target = $region36
      $region35: #{tpu_custom_call.1} parent=31 // pred_region
        %s181 = smul.u32 16, %s11
        %p182 = scmp.lt.s32.totalorder %s181, 31
        %s183 = scalar_select %p182, %s181, 31
        %s184 = smul.addr %s183, 4
        %s185 = scalar_lea.vmem %s0, %s184
        %s186 = smul.u32 16, %s11
      $region36: #{tpu_custom_call.1} parent=31 // pred_fallthru
        _
    $region32: #{tpu_custom_call.1} parent=5 // pred_fallthru
      _
    %p187 = scmp.le.s32.totalorder 1, %s11
    %p188 = scmp.lt.s32.totalorder %s11, 3
    %p189 = pnand %p187, %p188
    %p190 = pneg %p189
    // Predicated region
    $region37: #{tpu_custom_call.1} parent=5 // pred_check
      _
    $region38: #{tpu_custom_call.1} parent=5 // pred_check_branch
      %192 = sbr.rel (%p189) target = $region40
    $region39: #{tpu_custom_call.1} parent=5 // pred_region
      %s193 = ssub.s32 %s11, 1
      %s194 = smul.u32 16, %s16
      %p195 = scmp.lt.s32.totalorder %s194, 31
      %s196 = scalar_select %p195, %s194, 31
      %s197 = smul.addr %s196, 4
      %s198 = scalar_lea.vmem %s0, %s197
      %p199 = pneg %p37
      %p200 = pneg %p34
      %p201 = pneg %p58
      %p202 = pneg %p55
      %p203 = pneg %p79
      %p204 = pneg %p76
      %p205 = pneg %p100
      %p206 = pneg %p97
      %p207 = pneg %p121
      %p208 = pneg %p118
      %p209 = pneg %p147
      %p210 = pneg %p144
      %s211 = smul.u32 16, %s16
      %p212 = scmp.lt.s32.totalorder %s211, 31
      %s213 = scalar_select %p212, %s211, 31
      %s214 = smul.addr %s213, 8
      %s215 = scalar_lea.vmem %s5, %s214
      %s216 = smul.u32 16, %s16
      %p217 = scmp.lt.s32.totalorder %s216, 31
      %s218 = scalar_select %p217, %s216, 31
      %s219 = smul.addr %s218, 4
      %s220 = scalar_lea.vmem %s0, %s219
      %s221 = smul.u32 16, %s16
      %s222 = smul.u32 16, %s16
      %p223 = scmp.lt.s32.totalorder %s222, 31
      %s224 = scalar_select %p223, %s222, 31
      %s225 = smul.addr %s224, 8
      %s226 = scalar_lea.vmem %s5, %s225
      %s227 = smul.u32 16, %s16
      %v229 = vld [vmem:[%s220] sm:$0xf]
      %v230 = vld [vmem:[%s220 + $0x4] sm:$0xf]
      %v231 = vld [vmem:[%s220 + $0x8] sm:$0xf]
      %v232 = vld [vmem:[%s220 + $0xc] sm:$0xf]
      %v233 = vld [vmem:[%s220 + $0x10] sm:$0xf]
      %v234 = vld [vmem:[%s220 + $0x14] sm:$0xf]
      %v235 = vld [vmem:[%s220 + $0x18] sm:$0xf]
      %v236 = vld [vmem:[%s220 + $0x1c] sm:$0xf]
      %v237 = vld [vmem:[%s220 + $0x20] sm:$0xf]
      %v238 = vld [vmem:[%s220 + $0x24] sm:$0xf]
      %v239 = vld [vmem:[%s220 + $0x28] sm:$0xf]
      %v240 = vld [vmem:[%s220 + $0x2c] sm:$0xf]
      %v241 = vld [vmem:[%s220 + $0x30] sm:$0xf]
      %v242 = vld [vmem:[%s220 + $0x34] sm:$0xf]
      %v243 = vld [vmem:[%s220 + $0x38] sm:$0xf]
      %v244 = vld [vmem:[%s220 + $0x3c] sm:$0xf]
      %v245 = vld [vmem:[%s1] sm:$0xf]
      %v246 = vld [vmem:[%s1 + $0x4] sm:$0xf]
      %v247 = vld [vmem:[%s1 + $0x8] sm:$0xf]
      %v248 = vld [vmem:[%s1 + $0xc] sm:$0xf]
      %v249 = vld [vmem:[%s2] sm:$0x1]
      %v251 = vperm.slane %v249, 0
      %v269 = vunpack.c.l.b16 %v229
      %v270 = vunpack.c.l.b16 %v230
      %v271 = vunpack.c.l.b16 %v231
      %v272 = vunpack.c.l.b16 %v232
      %v273 = vunpack.c.l.b16 %v233
      %v274 = vunpack.c.l.b16 %v234
      %v275 = vunpack.c.l.b16 %v235
      %v276 = vunpack.c.l.b16 %v236
      %v277 = vunpack.c.l.b16 %v237
      %v278 = vunpack.c.l.b16 %v238
      %v279 = vunpack.c.l.b16 %v239
      %v280 = vunpack.c.l.b16 %v240
      %v281 = vunpack.c.l.b16 %v241
      %v282 = vunpack.c.l.b16 %v242
      %v283 = vunpack.c.l.b16 %v243
      %v284 = vunpack.c.l.b16 %v244
      %v285 = vpack.c.b16 %v270, %v269
      %v286 = vpack.c.b16 %v272, %v271
      %v287 = vpack.c.b16 %v274, %v273
      %v288 = vpack.c.b16 %v276, %v275
      %v289 = vpack.c.b16 %v278, %v277
      %v290 = vpack.c.b16 %v280, %v279
      %v291 = vpack.c.b16 %v282, %v281
      %v292 = vpack.c.b16 %v284, %v283
      %v297 = vunpack.c.l.b16 %v245
      %v298 = vunpack.c.l.b16 %v246
      %v299 = vunpack.c.l.b16 %v247
      %v300 = vunpack.c.l.b16 %v248
      %v301 = vpack.c.b16 %v298, %v297
      %v302 = vpack.c.b16 %v300, %v299
      %vm305 = vcmask 261120
      %v307 = vsel %vm305, %v285, 0
      %v310 = vsel %vm305, %v286, 0
      %v313 = vsel %vm305, %v287, 0
      %v316 = vsel %vm305, %v288, 0
      %v319 = vsel %vm305, %v289, 0
      %v322 = vsel %vm305, %v290, 0
      %v325 = vsel %vm305, %v291, 0
      %v328 = vsel %vm305, %v292, 0
      %330 = vmatpush.bf16.msra.mxu0 0
      %331 = vmatpush.bf16.msra.mxu0 0
      %332 = vmatpush.bf16.msra.mxu0 0
      %333 = vmatpush.bf16.msra.mxu0 0
      %334 = vmatpush.bf16.msra.mxu0 0
      %335 = vmatpush.bf16.msra.mxu0 0
      %336 = vmatpush.bf16.msra.mxu0 %v302
      %337 = vmatpush.bf16.msra.mxu0 %v301
      %338 = vmatmul.bf16.gmra.mxu0 %v307
      %v339 = vpop.f32.mrf.mxu0
      %v340 = vadd.f32 %v251, %v339
      %v341 = vpop.f32.mrf.mxu0
      %v342 = vadd.f32 %v251, %v341
      %343 = vmatmul.bf16.gmra.mxu0 %v310
      %v344 = vpop.f32.mrf.mxu0
      %v345 = vadd.f32 %v251, %v344
      %v346 = vpop.f32.mrf.mxu0
      %v347 = vadd.f32 %v251, %v346
      %348 = vmatmul.bf16.gmra.mxu0 %v313
      %v349 = vpop.f32.mrf.mxu0
      %v350 = vadd.f32 %v251, %v349
      %v351 = vpop.f32.mrf.mxu0
      %v352 = vadd.f32 %v251, %v351
      %353 = vmatmul.bf16.gmra.mxu0 %v316
      %v354 = vpop.f32.mrf.mxu0
      %v355 = vadd.f32 %v251, %v354
      %v356 = vpop.f32.mrf.mxu0
      %v357 = vadd.f32 %v251, %v356
      %358 = vmatmul.bf16.gmra.mxu0 %v319
      %v359 = vpop.f32.mrf.mxu0
      %v360 = vadd.f32 %v251, %v359
      %v361 = vpop.f32.mrf.mxu0
      %v362 = vadd.f32 %v251, %v361
      %363 = vmatmul.bf16.gmra.mxu0 %v322
      %v364 = vpop.f32.mrf.mxu0
      %v365 = vadd.f32 %v251, %v364
      %v366 = vpop.f32.mrf.mxu0
      %v367 = vadd.f32 %v251, %v366
      %368 = vmatmul.bf16.gmra.mxu0 %v325
      %v369 = vpop.f32.mrf.mxu0
      %v370 = vadd.f32 %v251, %v369
      %v371 = vpop.f32.mrf.mxu0
      %v372 = vadd.f32 %v251, %v371
      %373 = vmatmul.bf16.gmra.mxu0 %v328
      %v374 = vpop.f32.mrf.mxu0
      %v375 = vadd.f32 %v251, %v374
      %v376 = vpop.f32.mrf.mxu0
      %v377 = vadd.f32 %v251, %v376
      %378 = vdwg.mxu0
      %v379 = vxor.u32 %v340, 2147483648
      %v380 = vxor.u32 %v342, 2147483648
      %v381 = vxor.u32 %v345, 2147483648
      %v382 = vxor.u32 %v347, 2147483648
      %v383 = vxor.u32 %v350, 2147483648
      %v384 = vxor.u32 %v352, 2147483648
      %v385 = vxor.u32 %v355, 2147483648
      %v386 = vxor.u32 %v357, 2147483648
      %v387 = vxor.u32 %v360, 2147483648
      %v388 = vxor.u32 %v362, 2147483648
      %v389 = vxor.u32 %v365, 2147483648
      %v390 = vxor.u32 %v367, 2147483648
      %v391 = vxor.u32 %v370, 2147483648
      %v392 = vxor.u32 %v372, 2147483648
      %v393 = vxor.u32 %v375, 2147483648
      %v394 = vxor.u32 %v377, 2147483648
      %v395 = vmul.f32 %v379, 1.442695
      %v396 = vpow.pop %v395
      %v397 = vmul.f32 %v380, 1.442695
      %v398 = vpow.pop %v397
      %v399 = vmul.f32 %v381, 1.442695
      %v400 = vpow.pop %v399
      %v401 = vmul.f32 %v382, 1.442695
      %v402 = vpow.pop %v401
      %v403 = vmul.f32 %v383, 1.442695
      %v404 = vpow.pop %v403
      %v405 = vmul.f32 %v384, 1.442695
      %v406 = vpow.pop %v405
      %v407 = vmul.f32 %v385, 1.442695
      %v408 = vpow.pop %v407
      %v409 = vmul.f32 %v386, 1.442695
      %v410 = vpow.pop %v409
      %v411 = vmul.f32 %v387, 1.442695
      %v412 = vpow.pop %v411
      %v413 = vmul.f32 %v388, 1.442695
      %v414 = vpow.pop %v413
      %v415 = vmul.f32 %v389, 1.442695
      %v416 = vpow.pop %v415
      %v417 = vmul.f32 %v390, 1.442695
      %v418 = vpow.pop %v417
      %v419 = vmul.f32 %v391, 1.442695
      %v420 = vpow.pop %v419
      %v421 = vmul.f32 %v392, 1.442695
      %v422 = vpow.pop %v421
      %v423 = vmul.f32 %v393, 1.442695
      %v424 = vpow.pop %v423
      %v425 = vmul.f32 %v394, 1.442695
      %v426 = vpow.pop %v425
      %v427 = vadd.f32 %v396, 1.0
      %v428 = vadd.f32 %v398, 1.0
      %v429 = vadd.f32 %v400, 1.0
      %v430 = vadd.f32 %v402, 1.0
      %v431 = vadd.f32 %v404, 1.0
      %v432 = vadd.f32 %v406, 1.0
      %v433 = vadd.f32 %v408, 1.0
      %v434 = vadd.f32 %v410, 1.0
      %v435 = vadd.f32 %v412, 1.0
      %v436 = vadd.f32 %v414, 1.0
      %v437 = vadd.f32 %v416, 1.0
      %v438 = vadd.f32 %v418, 1.0
      %v439 = vadd.f32 %v420, 1.0
      %v440 = vadd.f32 %v422, 1.0
      %v441 = vadd.f32 %v424, 1.0
      %v442 = vadd.f32 %v426, 1.0
      %v443 = vrcp.pop %v427
      %v444 = vmul.f32 %v427, %v443
      %v445 = vsub.f32 1.0, %v444
      %v446 = vmul.f32 %v443, %v445
      %v447 = vadd.f32 %v443, %v446
      %vm448 = vweird.f32 %v427
      %vm449 = vweird.f32 %v443
      %vm450 = vmor %vm448, %vm449
      %v451 = vsel %vm450, %v443, %v447
      %v452 = vand.u32 2147483647, %v427
      %vm453 = vcmp.eq.f32.partialorder %v452, 8.507059e+37
      %v454 = vand.u32 %v427, 2147483648
      %v455 = vor.u32 1.1754944e-38, %v454
      %v456 = vsel %vm453, %v455, %v451
      %v457 = vmul.f32 1.0, %v456
      %v458 = vrcp.pop %v428
      %v459 = vmul.f32 %v428, %v458
      %v460 = vsub.f32 1.0, %v459
      %v461 = vmul.f32 %v458, %v460
      %v462 = vadd.f32 %v458, %v461
      %vm463 = vweird.f32 %v428
      %vm464 = vweird.f32 %v458
      %vm465 = vmor %vm463, %vm464
      %v466 = vsel %vm465, %v458, %v462
      %v467 = vand.u32 2147483647, %v428
      %vm468 = vcmp.eq.f32.partialorder %v467, 8.507059e+37
      %v469 = vand.u32 %v428, 2147483648
      %v470 = vor.u32 1.1754944e-38, %v469
      %v471 = vsel %vm468, %v470, %v466
      %v472 = vmul.f32 1.0, %v471
      %v473 = vrcp.pop %v429
      %v474 = vmul.f32 %v429, %v473
      %v475 = vsub.f32 1.0, %v474
      %v476 = vmul.f32 %v473, %v475
      %v477 = vadd.f32 %v473, %v476
      %vm478 = vweird.f32 %v429
      %vm479 = vweird.f32 %v473
      %vm480 = vmor %vm478, %vm479
      %v481 = vsel %vm480, %v473, %v477
      %v482 = vand.u32 2147483647, %v429
      %vm483 = vcmp.eq.f32.partialorder %v482, 8.507059e+37
      %v484 = vand.u32 %v429, 2147483648
      %v485 = vor.u32 1.1754944e-38, %v484
      %v486 = vsel %vm483, %v485, %v481
      %v487 = vmul.f32 1.0, %v486
      %v488 = vrcp.pop %v430
      %v489 = vmul.f32 %v430, %v488
      %v490 = vsub.f32 1.0, %v489
      %v491 = vmul.f32 %v488, %v490
      %v492 = vadd.f32 %v488, %v491
      %vm493 = vweird.f32 %v430
      %vm494 = vweird.f32 %v488
      %vm495 = vmor %vm493, %vm494
      %v496 = vsel %vm495, %v488, %v492
      %v497 = vand.u32 2147483647, %v430
      %vm498 = vcmp.eq.f32.partialorder %v497, 8.507059e+37
      %v499 = vand.u32 %v430, 2147483648
      %v500 = vor.u32 1.1754944e-38, %v499
      %v501 = vsel %vm498, %v500, %v496
      %v502 = vmul.f32 1.0, %v501
      %v503 = vrcp.pop %v431
      %v504 = vmul.f32 %v431, %v503
      %v505 = vsub.f32 1.0, %v504
      %v506 = vmul.f32 %v503, %v505
      %v507 = vadd.f32 %v503, %v506
      %vm508 = vweird.f32 %v431
      %vm509 = vweird.f32 %v503
      %vm510 = vmor %vm508, %vm509
      %v511 = vsel %vm510, %v503, %v507
      %v512 = vand.u32 2147483647, %v431
      %vm513 = vcmp.eq.f32.partialorder %v512, 8.507059e+37
      %v514 = vand.u32 %v431, 2147483648
      %v515 = vor.u32 1.1754944e-38, %v514
      %v516 = vsel %vm513, %v515, %v511
      %v517 = vmul.f32 1.0, %v516
      %v518 = vrcp.pop %v432
      %v519 = vmul.f32 %v432, %v518
      %v520 = vsub.f32 1.0, %v519
      %v521 = vmul.f32 %v518, %v520
      %v522 = vadd.f32 %v518, %v521
      %vm523 = vweird.f32 %v432
      %vm524 = vweird.f32 %v518
      %vm525 = vmor %vm523, %vm524
      %v526 = vsel %vm525, %v518, %v522
      %v527 = vand.u32 2147483647, %v432
      %vm528 = vcmp.eq.f32.partialorder %v527, 8.507059e+37
      %v529 = vand.u32 %v432, 2147483648
      %v530 = vor.u32 1.1754944e-38, %v529
      %v531 = vsel %vm528, %v530, %v526
      %v532 = vmul.f32 1.0, %v531
      %v533 = vrcp.pop %v433
      %v534 = vmul.f32 %v433, %v533
      %v535 = vsub.f32 1.0, %v534
      %v536 = vmul.f32 %v533, %v535
      %v537 = vadd.f32 %v533, %v536
      %vm538 = vweird.f32 %v433
      %vm539 = vweird.f32 %v533
      %vm540 = vmor %vm538, %vm539
      %v541 = vsel %vm540, %v533, %v537
      %v542 = vand.u32 2147483647, %v433
      %vm543 = vcmp.eq.f32.partialorder %v542, 8.507059e+37
      %v544 = vand.u32 %v433, 2147483648
      %v545 = vor.u32 1.1754944e-38, %v544
      %v546 = vsel %vm543, %v545, %v541
      %v547 = vmul.f32 1.0, %v546
      %v548 = vrcp.pop %v434
      %v549 = vmul.f32 %v434, %v548
      %v550 = vsub.f32 1.0, %v549
      %v551 = vmul.f32 %v548, %v550
      %v552 = vadd.f32 %v548, %v551
      %vm553 = vweird.f32 %v434
      %vm554 = vweird.f32 %v548
      %vm555 = vmor %vm553, %vm554
      %v556 = vsel %vm555, %v548, %v552
      %v557 = vand.u32 2147483647, %v434
      %vm558 = vcmp.eq.f32.partialorder %v557, 8.507059e+37
      %v559 = vand.u32 %v434, 2147483648
      %v560 = vor.u32 1.1754944e-38, %v559
      %v561 = vsel %vm558, %v560, %v556
      %v562 = vmul.f32 1.0, %v561
      %v563 = vrcp.pop %v435
      %v564 = vmul.f32 %v435, %v563
      %v565 = vsub.f32 1.0, %v564
      %v566 = vmul.f32 %v563, %v565
      %v567 = vadd.f32 %v563, %v566
      %vm568 = vweird.f32 %v435
      %vm569 = vweird.f32 %v563
      %vm570 = vmor %vm568, %vm569
      %v571 = vsel %vm570, %v563, %v567
      %v572 = vand.u32 2147483647, %v435
      %vm573 = vcmp.eq.f32.partialorder %v572, 8.507059e+37
      %v574 = vand.u32 %v435, 2147483648
      %v575 = vor.u32 1.1754944e-38, %v574
      %v576 = vsel %vm573, %v575, %v571
      %v577 = vmul.f32 1.0, %v576
      %v578 = vrcp.pop %v436
      %v579 = vmul.f32 %v436, %v578
      %v580 = vsub.f32 1.0, %v579
      %v581 = vmul.f32 %v578, %v580
      %v582 = vadd.f32 %v578, %v581
      %vm583 = vweird.f32 %v436
      %vm584 = vweird.f32 %v578
      %vm585 = vmor %vm583, %vm584
      %v586 = vsel %vm585, %v578, %v582
      %v587 = vand.u32 2147483647, %v436
      %vm588 = vcmp.eq.f32.partialorder %v587, 8.507059e+37
      %v589 = vand.u32 %v436, 2147483648
      %v590 = vor.u32 1.1754944e-38, %v589
      %v591 = vsel %vm588, %v590, %v586
      %v592 = vmul.f32 1.0, %v591
      %v593 = vrcp.pop %v437
      %v594 = vmul.f32 %v437, %v593
      %v595 = vsub.f32 1.0, %v594
      %v596 = vmul.f32 %v593, %v595
      %v597 = vadd.f32 %v593, %v596
      %vm598 = vweird.f32 %v437
      %vm599 = vweird.f32 %v593
      %vm600 = vmor %vm598, %vm599
      %v601 = vsel %vm600, %v593, %v597
      %v602 = vand.u32 2147483647, %v437
      %vm603 = vcmp.eq.f32.partialorder %v602, 8.507059e+37
      %v604 = vand.u32 %v437, 2147483648
      %v605 = vor.u32 1.1754944e-38, %v604
      %v606 = vsel %vm603, %v605, %v601
      %v607 = vmul.f32 1.0, %v606
      %v608 = vrcp.pop %v438
      %v609 = vmul.f32 %v438, %v608
      %v610 = vsub.f32 1.0, %v609
      %v611 = vmul.f32 %v608, %v610
      %v612 = vadd.f32 %v608, %v611
      %vm613 = vweird.f32 %v438
      %vm614 = vweird.f32 %v608
      %vm615 = vmor %vm613, %vm614
      %v616 = vsel %vm615, %v608, %v612
      %v617 = vand.u32 2147483647, %v438
      %vm618 = vcmp.eq.f32.partialorder %v617, 8.507059e+37
      %v619 = vand.u32 %v438, 2147483648
      %v620 = vor.u32 1.1754944e-38, %v619
      %v621 = vsel %vm618, %v620, %v616
      %v622 = vmul.f32 1.0, %v621
      %v623 = vrcp.pop %v439
      %v624 = vmul.f32 %v439, %v623
      %v625 = vsub.f32 1.0, %v624
      %v626 = vmul.f32 %v623, %v625
      %v627 = vadd.f32 %v623, %v626
      %vm628 = vweird.f32 %v439
      %vm629 = vweird.f32 %v623
      %vm630 = vmor %vm628, %vm629
      %v631 = vsel %vm630, %v623, %v627
      %v632 = vand.u32 2147483647, %v439
      %vm633 = vcmp.eq.f32.partialorder %v632, 8.507059e+37
      %v634 = vand.u32 %v439, 2147483648
      %v635 = vor.u32 1.1754944e-38, %v634
      %v636 = vsel %vm633, %v635, %v631
      %v637 = vmul.f32 1.0, %v636
      %v638 = vrcp.pop %v440
      %v639 = vmul.f32 %v440, %v638
      %v640 = vsub.f32 1.0, %v639
      %v641 = vmul.f32 %v638, %v640
      %v642 = vadd.f32 %v638, %v641
      %vm643 = vweird.f32 %v440
      %vm644 = vweird.f32 %v638
      %vm645 = vmor %vm643, %vm644
      %v646 = vsel %vm645, %v638, %v642
      %v647 = vand.u32 2147483647, %v440
      %vm648 = vcmp.eq.f32.partialorder %v647, 8.507059e+37
      %v649 = vand.u32 %v440, 2147483648
      %v650 = vor.u32 1.1754944e-38, %v649
      %v651 = vsel %vm648, %v650, %v646
      %v652 = vmul.f32 1.0, %v651
      %v653 = vrcp.pop %v441
      %v654 = vmul.f32 %v441, %v653
      %v655 = vsub.f32 1.0, %v654
      %v656 = vmul.f32 %v653, %v655
      %v657 = vadd.f32 %v653, %v656
      %vm658 = vweird.f32 %v441
      %vm659 = vweird.f32 %v653
      %vm660 = vmor %vm658, %vm659
      %v661 = vsel %vm660, %v653, %v657
      %v662 = vand.u32 2147483647, %v441
      %vm663 = vcmp.eq.f32.partialorder %v662, 8.507059e+37
      %v664 = vand.u32 %v441, 2147483648
      %v665 = vor.u32 1.1754944e-38, %v664
      %v666 = vsel %vm663, %v665, %v661
      %v667 = vmul.f32 1.0, %v666
      %v668 = vrcp.pop %v442
      %v669 = vmul.f32 %v442, %v668
      %v670 = vsub.f32 1.0, %v669
      %v671 = vmul.f32 %v668, %v670
      %v672 = vadd.f32 %v668, %v671
      %vm673 = vweird.f32 %v442
      %vm674 = vweird.f32 %v668
      %vm675 = vmor %vm673, %vm674
      %v676 = vsel %vm675, %v668, %v672
      %v677 = vand.u32 2147483647, %v442
      %vm678 = vcmp.eq.f32.partialorder %v677, 8.507059e+37
      %v679 = vand.u32 %v442, 2147483648
      %v680 = vor.u32 1.1754944e-38, %v679
      %v681 = vsel %vm678, %v680, %v676
      %v682 = vmul.f32 1.0, %v681
      %v683 = vpack.c.bf16 %v472, %v457
      %v684 = vpack.c.bf16 %v502, %v487
      %v685 = vpack.c.bf16 %v532, %v517
      %v686 = vpack.c.bf16 %v562, %v547
      %v687 = vpack.c.bf16 %v592, %v577
      %v688 = vpack.c.bf16 %v622, %v607
      %v689 = vpack.c.bf16 %v652, %v637
      %v690 = vpack.c.bf16 %v682, %v667
      %v691 = vld [vmem:[%s3] sm:$0xf]
      %v692 = vld [vmem:[%s3 + $0x4] sm:$0xf]
      %v693 = vld [vmem:[%s3 + $0x8] sm:$0xf]
      %v694 = vld [vmem:[%s3 + $0xc] sm:$0xf]
      %v695 = vld [vmem:[%s3 + $0x10] sm:$0xf]
      %v696 = vld [vmem:[%s3 + $0x14] sm:$0xf]
      %v697 = vld [vmem:[%s3 + $0x18] sm:$0xf]
      %v698 = vld [vmem:[%s3 + $0x1c] sm:$0xf]
      %v699 = vld [vmem:[%s4] sm:$0x1]
      %v701 = vperm.slane %v699, 0
      %v711 = vunpack.c.l.b16 %v691
      %v712 = vunpack.c.l.b16 %v692
      %v713 = vunpack.c.l.b16 %v693
      %v714 = vunpack.c.l.b16 %v694
      %v715 = vunpack.c.l.b16 %v695
      %v716 = vunpack.c.l.b16 %v696
      %v717 = vunpack.c.l.b16 %v697
      %v718 = vunpack.c.l.b16 %v698
      %v719 = vpack.c.b16 %v712, %v711
      %v720 = vpack.c.b16 %v714, %v713
      %v721 = vpack.c.b16 %v716, %v715
      %v722 = vpack.c.b16 %v718, %v717
      %vm727 = vcmask 523264
      %v729 = vsel %vm727, %v683, 0
      %v732 = vsel %vm727, %v684, 0
      %v735 = vsel %vm727, %v685, 0
      %v738 = vsel %vm727, %v686, 0
      %v741 = vsel %vm727, %v687, 0
      %v744 = vsel %vm727, %v688, 0
      %v747 = vsel %vm727, %v689, 0
      %v750 = vsel %vm727, %v690, 0
      %752 = vmatpush.bf16.msra.mxu0 0
      %753 = vmatpush.bf16.msra.mxu0 0
      %754 = vmatpush.bf16.msra.mxu0 0
      %755 = vmatpush.bf16.msra.mxu0 0
      %756 = vmatpush.bf16.msra.mxu0 %v722
      %757 = vmatpush.bf16.msra.mxu0 %v721
      %758 = vmatpush.bf16.msra.mxu0 %v720
      %759 = vmatpush.bf16.msra.mxu0 %v719
      %760 = vmatmul.bf16.gmra.mxu0 %v729
      %v761 = vpop.f32.mrf.mxu0
      %v762 = vadd.f32 %v701, %v761
      %v763 = vpop.f32.mrf.mxu0
      %v764 = vadd.f32 %v701, %v763
      %765 = vmatmul.bf16.gmra.mxu0 %v732
      %v766 = vpop.f32.mrf.mxu0
      %v767 = vadd.f32 %v701, %v766
      %v768 = vpop.f32.mrf.mxu0
      %v769 = vadd.f32 %v701, %v768
      %770 = vmatmul.bf16.gmra.mxu0 %v735
      %v771 = vpop.f32.mrf.mxu0
      %v772 = vadd.f32 %v701, %v771
      %v773 = vpop.f32.mrf.mxu0
      %v774 = vadd.f32 %v701, %v773
      %775 = vmatmul.bf16.gmra.mxu0 %v738
      %v776 = vpop.f32.mrf.mxu0
      %v777 = vadd.f32 %v701, %v776
      %v778 = vpop.f32.mrf.mxu0
      %v779 = vadd.f32 %v701, %v778
      %780 = vmatmul.bf16.gmra.mxu0 %v741
      %v781 = vpop.f32.mrf.mxu0
      %v782 = vadd.f32 %v701, %v781
      %v783 = vpop.f32.mrf.mxu0
      %v784 = vadd.f32 %v701, %v783
      %785 = vmatmul.bf16.gmra.mxu0 %v744
      %v786 = vpop.f32.mrf.mxu0
      %v787 = vadd.f32 %v701, %v786
      %v788 = vpop.f32.mrf.mxu0
      %v789 = vadd.f32 %v701, %v788
      %790 = vmatmul.bf16.gmra.mxu0 %v747
      %v791 = vpop.f32.mrf.mxu0
      %v792 = vadd.f32 %v701, %v791
      %v793 = vpop.f32.mrf.mxu0
      %v794 = vadd.f32 %v701, %v793
      %795 = vmatmul.bf16.gmra.mxu0 %v750
      %v796 = vpop.f32.mrf.mxu0
      %v797 = vadd.f32 %v701, %v796
      %v798 = vpop.f32.mrf.mxu0
      %v799 = vadd.f32 %v701, %v798
      %800 = vdwg.mxu0
      %vm801 = vcmask 130048
      %802 = vst.msk [vmem:[%s226] sm:$0xff] %vm801, %v762
      %803 = vst.msk [vmem:[%s226 + $0x8] sm:$0xff] %vm801, %v764
      %804 = vst.msk [vmem:[%s226 + $0x10] sm:$0xff] %vm801, %v767
      %805 = vst.msk [vmem:[%s226 + $0x18] sm:$0xff] %vm801, %v769
      %806 = vst.msk [vmem:[%s226 + $0x20] sm:$0xff] %vm801, %v772
      %807 = vst.msk [vmem:[%s226 + $0x28] sm:$0xff] %vm801, %v774
      %808 = vst.msk [vmem:[%s226 + $0x30] sm:$0xff] %vm801, %v777
      %809 = vst.msk [vmem:[%s226 + $0x38] sm:$0xff] %vm801, %v779
      %810 = vst.msk [vmem:[%s226 + $0x40] sm:$0xff] %vm801, %v782
      %811 = vst.msk [vmem:[%s226 + $0x48] sm:$0xff] %vm801, %v784
      %812 = vst.msk [vmem:[%s226 + $0x50] sm:$0xff] %vm801, %v787
      %813 = vst.msk [vmem:[%s226 + $0x58] sm:$0xff] %vm801, %v789
      %814 = vst.msk [vmem:[%s226 + $0x60] sm:$0xff] %vm801, %v792
      %815 = vst.msk [vmem:[%s226 + $0x68] sm:$0xff] %vm801, %v794
      %816 = vst.msk [vmem:[%s226 + $0x70] sm:$0xff] %vm801, %v797
      %817 = vst.msk [vmem:[%s226 + $0x78] sm:$0xff] %vm801, %v799
      %s818 = smul.u32 16, %s16
      %p819 = scmp.lt.s32.totalorder %s818, 31
      %s820 = scalar_select %p819, %s818, 31
      %s821 = smul.addr %s820, 8
      %s822 = scalar_lea.vmem %s5, %s821
      // Predicated region
      $region41: #{tpu_custom_call.1} parent=39 // pred_check
        %p823 = pneg %p144
      $region42: #{tpu_custom_call.1} parent=39 // pred_check_branch
        %825 = sbr.rel (%p823) target = $region44
      $region43: #{tpu_custom_call.1} parent=39 // pred_region
        %s826 = smul.u32 16, %s16
      $region44: #{tpu_custom_call.1} parent=39 // pred_fallthru
        _
    $region40: #{tpu_custom_call.1} parent=5 // pred_fallthru
      _
    %p827 = scmp.le.s32.totalorder 2, %s11
    // Predicated region
    $region45: #{tpu_custom_call.1} parent=5 // pred_check
      %p828 = pneg %p827
    $region46: #{tpu_custom_call.1} parent=5 // pred_check_branch
      %830 = sbr.rel (%p828) target = $region48
    $region47: #{tpu_custom_call.1} parent=5 // pred_region
      %s831 = ssub.s32 %s11, 2
      // Predicated region
      $region49: #{tpu_custom_call.1} parent=47 // pred_check
        %p832 = pneg %p150
      $region50: #{tpu_custom_call.1} parent=47 // pred_check_branch
        %834 = sbr.rel (%p832) target = $region52
      $region51: #{tpu_custom_call.1} parent=47 // pred_region
        %s835 = smul.u32 16, %s17
        %p836 = scmp.lt.s32.totalorder %s835, 31
        %s837 = scalar_select %p836, %s835, 31
        %s838 = smul.addr %s837, 8
        %s839 = scalar_lea.vmem %s5, %s838
      $region52: #{tpu_custom_call.1} parent=47 // pred_fallthru
        _
    $region48: #{tpu_custom_call.1} parent=5 // pred_fallthru
      _
  $region6: #{tpu_custom_call.1} parent=0 // loop_footer
    %s15 = sadd.s32 1, %s11
  $region7: #{tpu_custom_call.1} parent=0 // loop_footer_branch
    %10 = sbr.rel target = $region3
  $region8: #{tpu_custom_call.1} parent=0 // loop_exit
    _

</llo_original>
